<compile_context>
chip_gen: v5e
topology: v5e:2x2
jax: 0.10.0
libtpu: 0.0.40
codegen_flags: <defaults>
</compile_context>

<pallas_src>
import functools
from typing import NamedTuple

import jax
import jax.numpy as jnp
from jax.experimental import pallas as pl
from jax.experimental.pallas import tpu as pltpu


class _Cfg(NamedTuple):
    target_block_bytes: int
    vmem_limit_bytes: int
    two_tensorcores: bool
    input_buffers: int


@functools.lru_cache(maxsize=1)
def _device_config():
    kind = ""
    try:
        kind = jax.devices()[0].device_kind.lower()
    except Exception:
        pass
    if "v7" in kind:
        # 2 TensorCores / 64 MiB VMEM per core: modest blocks, deeper input
        # buffering, and force >= 2 grid steps so both cores get work.
        return _Cfg(4 << 20, 32 << 20, True, 3)
    if any(t in kind for t in ("v5e", "v5 lite", "v5lite", "v6e", "v6 lite", "v6lite")):
        # Single TensorCore / 128 MiB VMEM: big blocks amortize the ~0.35us
        # per-grid-step overhead; grid splitting would be a pure loss.
        return _Cfg(12 << 20, 64 << 20, False, 2)
    # Unknown generation: conservative settings that fit everywhere.
    return _Cfg(4 << 20, 32 << 20, False, 2)


def _round_up(x, m):
    return (x + m - 1) // m * m


def _x_block_spec(block_shape, index_map, cfg):
    """BlockSpec for the streamed x input; triple-buffered on v7x."""
    if cfg.input_buffers > 2:
        try:
            return pl.BlockSpec(block_shape, index_map,
                                pipeline_mode=pl.Buffered(cfg.input_buffers))
        except (TypeError, AttributeError):  # older jax: plain double-buffer
            pass
    return pl.BlockSpec(block_shape, index_map)


def _pick_rows_block(R, useful_row_bytes, padded_row_bytes, cfg):
    """Row tile sized by useful HBM bytes, capped by padded VMEM footprint,
    preferring a size that divides R (no padded tail block)."""
    n_bufs = cfg.input_buffers + 2          # x in-buffers + 2 out-buffers
    padded_budget = (cfg.vmem_limit_bytes * 85 // 100) // n_bufs
    tr = min(cfg.target_block_bytes // max(useful_row_bytes, 1),
             padded_budget // max(padded_row_bytes, 1))
    tr = max(8, tr // 8 * 8)
    if tr >= R:
        if (cfg.two_tensorcores and R >= 16
                and (R // 2) * useful_row_bytes >= (2 << 20)):
            return _round_up(-(-R // 2), 8)   # one half per v7x TensorCore
        return R
    for cand in range(tr, max(8, tr // 2) - 1, -8):
        if R % cand == 0:
            return cand
    return tr


def _pick_cf_blocks(N, Cb, L, itemsize, cfg):
    """(batch, lane) tile for a (N, Cb, L) channels_first array."""
    n_bufs = cfg.input_buffers + 2
    padded_budget = (cfg.vmem_limit_bytes * 85 // 100) // n_bufs
    useful_col = Cb * itemsize                      # one lane position, one n
    padded_col = _round_up(Cb, 8) * itemsize
    slab_useful = useful_col * L                    # one full batch element
    slab_padded = padded_col * _round_up(L, 128)

    if slab_useful >= cfg.target_block_bytes or slab_padded > padded_budget:
        tn = 1
        tl = min(cfg.target_block_bytes // max(useful_col, 1),
                 padded_budget // max(padded_col, 1))
        tl = max(128, tl // 128 * 128)
        if tl >= L:
            tl = L
        else:
            for cand in range(tl, max(128, tl // 2) - 1, -128):
                if L % cand == 0:
                    tl = cand
                    break
    else:
        tl = L
        tn = min(cfg.target_block_bytes // max(slab_useful, 1),
                 padded_budget // max(slab_padded, 1))
        tn = max(1, min(tn, N))

    if cfg.two_tensorcores and tn >= N and tl >= L:
        # Give both v7x TensorCores work, but only if each half is big enough
        # that the per-step overhead stays negligible.
        if N >= 2 and (N // 2) * slab_useful >= (2 << 20):
            tn = -(-N // 2)
        elif L >= 256 and (L // 2) * useful_col >= (2 << 20):
            tl = _round_up(-(-L // 2), 128)
    return tn, tl


# ---------------------------------------------------------------------------
# Kernels
# ---------------------------------------------------------------------------

def _ln_rows_mxu_kernel(x_ref, w_ref, b_ref, seg_ref, o_ref, *, eps, inv_c):
    """channels_last, C <= 128 (optionally k rows lane-packed per block row).

    x_ref: (tr, W) with W = k*C.  seg_ref is a (W, W) 0/1 block-diagonal f32
    matrix: x @ seg gives each segment's row-sum already broadcast across that
    segment's C lanes, so mean/var/inv need no further lane broadcast and the
    XLU stays idle.  Reductions run on the MXU in f32 (HIGHEST precision)."""
    x = x_ref[...].astype(jnp.float32)
    seg = seg_ref[...]
    hi = jax.lax.Precision.HIGHEST
    s1 = jnp.dot(x, seg, preferred_element_type=jnp.float32, precision=hi)
    s2 = jnp.dot(x * x, seg, preferred_element_type=jnp.float32, precision=hi)
    mean = s1 * inv_c
    var = jnp.maximum(s2 * inv_c - mean * mean, 0.0)    # biased variance
    inv = jax.lax.rsqrt(var + eps)
    o_ref[...] = ((x - mean) * inv * w_ref[...] + b_ref[...]).astype(o_ref.dtype)


def _ln_rows_reduce_kernel(x_ref, w_ref, b_ref, o_ref, *, eps, inv_c):
    """channels_last, large C: fused single-pass lane reduction (no MXU)."""
    x = x_ref[...].astype(jnp.float32)
    s1 = jnp.sum(x, axis=-1, keepdims=True)
    s2 = jnp.sum(x * x, axis=-1, keepdims=True)
    mean = s1 * inv_c
    var = jnp.maximum(s2 * inv_c - mean * mean, 0.0)
    inv = jax.lax.rsqrt(var + eps)
    o_ref[...] = ((x - mean) * inv * w_ref[...] + b_ref[...]).astype(o_ref.dtype)


def _ln_chan_kernel(x_ref, w_ref, b_ref, o_ref, *, eps, inv_c, c, k):
    """channels_first: x_ref is (tn, k*C, tl); k batch elements are sublane-
    packed per block row; each C-sublane segment is normalized independently
    while spatial positions stay lane-dense."""
    x = x_ref[...].astype(jnp.float32)
    w = w_ref[...]
    b = b_ref[...]
    for j in range(k):                      # k <= 8, unrolled at trace time
        lo, hi = j * c, (j + 1) * c
        xs = x[:, lo:hi, :]
        s1 = jnp.sum(xs, axis=1, keepdims=True)
        s2 = jnp.sum(xs * xs, axis=1, keepdims=True)
        mean = s1 * inv_c
        var = jnp.maximum(s2 * inv_c - mean * mean, 0.0)
        inv = jax.lax.rsqrt(var + eps)
        ys = (xs - mean) * inv * w[:, lo:hi, :] + b[:, lo:hi, :]
        o_ref[:, lo:hi, :] = ys.astype(o_ref.dtype)


# ---------------------------------------------------------------------------
# Wrappers
# ---------------------------------------------------------------------------

def _layernorm_rows(x2, weight, bias, eps, cfg):
    """LayerNorm over the last axis of a (R, C) array."""
    R, C = x2.shape
    itemsize = x2.dtype.itemsize

    # Lane-pack k rows per block row when C < 128 (free contiguous reshape)
    # so loads / compute / stores are lane-dense.  Requires k | R.
    k = 1
    if C < 128:
        for cand in range(max(1, 128 // C), 0, -1):
            if R % cand == 0:
                k = cand
                break
    W, Rp = k * C, R // k
    xp = x2.reshape(Rp, W)

    w_f32 = weight.astype(jnp.float32)
    b_f32 = bias.astype(jnp.float32)
    wp = (jnp.tile(w_f32, k) if k > 1 else w_f32).reshape(1, W)
    bp = (jnp.tile(b_f32, k) if k > 1 else b_f32).reshape(1, W)

    useful_row_bytes = W * itemsize
    padded_row_bytes = _round_up(W, 128) * itemsize
    tr = _pick_rows_block(Rp, useful_row_bytes, padded_row_bytes, cfg)
    grid = (pl.cdiv(Rp, tr),)

    x_spec = _x_block_spec((tr, W), lambda i: (i, 0), cfg)
    wb_spec = pl.BlockSpec((1, W), lambda i: (0, 0))
    out_spec = pl.BlockSpec((tr, W), lambda i: (i, 0))
    params = pltpu.CompilerParams(
        dimension_semantics=("parallel",),
        vmem_limit_bytes=cfg.vmem_limit_bytes)

    if C <= 128:
        # 0/1 block-diagonal segment matrix (all-ones (C,C) blocks).
        lane = jnp.arange(W)
        seg = (lane[:, None] // C == lane[None, :] // C).astype(jnp.float32)
        kernel = functools.partial(_ln_rows_mxu_kernel,
                                   eps=float(eps), inv_c=1.0 / C)
        yp = pl.pallas_call(
            kernel,
            out_shape=jax.ShapeDtypeStruct((Rp, W), x2.dtype),
            grid_spec=pltpu.PrefetchScalarGridSpec(
                num_scalar_prefetch=0,
                grid=grid,
                in_specs=[x_spec, wb_spec, wb_spec,
                          pl.BlockSpec((W, W), lambda i: (0, 0))],
                out_specs=out_spec,
            ),
            compiler_params=params,
        )(xp, wp, bp, seg)
    else:
        # Large C: MXU reduction would scale as C^2; use the lane reduce.
        kernel = functools.partial(_ln_rows_reduce_kernel,
                                   eps=float(eps), inv_c=1.0 / C)
        yp = pl.pallas_call(
            kernel,
            out_shape=jax.ShapeDtypeStruct((Rp, W), x2.dtype),
            grid_spec=pltpu.PrefetchScalarGridSpec(
                num_scalar_prefetch=0,
                grid=grid,
                in_specs=[x_spec, wb_spec, wb_spec],
                out_specs=out_spec,
            ),
            compiler_params=params,
        )(xp, wp, bp)
    return yp.reshape(R, C)


def _layernorm_channels_first(x3, weight, bias, eps, cfg):
    """LayerNorm over axis 1 of a (N, C, L) array (no transposes)."""
    N, C, L = x3.shape
    itemsize = x3.dtype.itemsize

    # Sublane-pack k batch elements per block row when C < 8 (free reshape).
    k = 1
    if C < 8:
        for cand in range(max(1, 8 // C), 0, -1):
            if N % cand == 0:
                k = cand
                break
    Cb, Np = k * C, N // k
    xp = x3.reshape(Np, Cb, L)

    w_f32 = weight.astype(jnp.float32)
    b_f32 = bias.astype(jnp.float32)
    wp = (jnp.tile(w_f32, k) if k > 1 else w_f32).reshape(1, Cb, 1)
    bp = (jnp.tile(b_f32, k) if k > 1 else b_f32).reshape(1, Cb, 1)

    tn, tl = _pick_cf_blocks(Np, Cb, L, itemsize, cfg)
    grid = (pl.cdiv(Np, tn), pl.cdiv(L, tl))

    kernel = functools.partial(_ln_chan_kernel, eps=float(eps),
                               inv_c=1.0 / C, c=C, k=k)
    yp = pl.pallas_call(
        kernel,
        out_shape=jax.ShapeDtypeStruct((Np, Cb, L), x3.dtype),
        grid_spec=pltpu.PrefetchScalarGridSpec(
            num_scalar_prefetch=0,
            grid=grid,
            in_specs=[
                _x_block_spec((tn, Cb, tl), lambda n, l: (n, 0, l), cfg),
                pl.BlockSpec((1, Cb, 1), lambda n, l: (0, 0, 0)),
                pl.BlockSpec((1, Cb, 1), lambda n, l: (0, 0, 0)),
            ],
            out_specs=pl.BlockSpec((tn, Cb, tl), lambda n, l: (n, 0, l)),
        ),
        compiler_params=pltpu.CompilerParams(
            dimension_semantics=("parallel", "parallel"),
            vmem_limit_bytes=cfg.vmem_limit_bytes),
    )(xp, wp, bp)
    return yp.reshape(N, C, L)


def layer_norm(x, weight, bias, eps=1e-6, data_format="channels_last",
               *, block_bytes=None):
    """Matches the PyTorch LayerNorm module's forward semantics."""
    cfg = _device_config()
    if block_bytes is not None:
        cfg = cfg._replace(target_block_bytes=int(block_bytes))
    if data_format == "channels_last":
        C = x.shape[-1]
        y = _layernorm_rows(x.reshape(-1, C), weight, bias, eps, cfg)
        return y.reshape(x.shape)
    elif data_format == "channels_first":
        # (N, C, *spatial): normalize over axis 1.  Flattening the spatial
        # dims is a free contiguous reshape; no transposes are performed.
        N, C = x.shape[0], x.shape[1]
        y = _layernorm_channels_first(x.reshape(N, C, -1), weight, bias, eps, cfg)
        return y.reshape(x.shape)
    else:
        raise NotImplementedError


# ---------------------------------------------------------------------------
# Reference + demo
# ---------------------------------------------------------------------------

def _reference(x, weight, bias, eps, data_format):
    if data_format == "channels_last":
        u = jnp.mean(x, axis=-1, keepdims=True)
        s = jnp.mean((x - u) ** 2, axis=-1, keepdims=True)
        return (x - u) / jnp.sqrt(s + eps) * weight + bias
    else:
        u = jnp.mean(x, axis=1, keepdims=True)
        s = jnp.mean((x - u) ** 2, axis=1, keepdims=True)
        xn = (x - u) / jnp.sqrt(s + eps)
        wb = weight.reshape((1, -1) + (1,) * (x.ndim - 2))
        bb = bias.reshape((1, -1) + (1,) * (x.ndim - 2))
        return wb * xn + bb


def _check(y, x, ref):
    assert y.shape == x.shape and y.dtype == x.dtype
    assert jnp.allclose(y, ref, atol=1e-5, rtol=1e-5)


if __name__ == "__main__":
    key = jax.random.PRNGKey(0)
    k1, k2, k3, k4, k5, k6 = jax.random.split(key, 6)
    eps = 1e-6

    def make_params(C):
        w = jnp.ones((C,), jnp.float32) + 0.1 * jnp.arange(C, dtype=jnp.float32) / C
        b = 0.05 * jnp.arange(C, dtype=jnp.float32) / C
        return w, b

    # --- channels_last, C=32: lane-packed (k=4) MXU-reduction path ---
    C = 32
    x_cl = jax.random.normal(k1, (2, 8, 8, C), dtype=jnp.float32)
    w_cl, b_cl = make_params(C)
    y_cl = layer_norm(x_cl, w_cl, b_cl, eps=eps, data_format="channels_last")
    jax.block_until_ready(y_cl)
    _check(y_cl, x_cl, _reference(x_cl, w_cl, b_cl, eps, "channels_last"))

    # --- channels_first, C=4: sublane-packed (k=2) path ---
    C = 4
    x_cf = jax.random.normal(k2, (2, C, 16, 16), dtype=jnp.float32)
    w_cf, b_cf = make_params(C)
    y_cf = layer_norm(x_cf, w_cf, b_cf, eps=eps, data_format="channels_first")
    jax.block_until_ready(y_cf)
    _check(y_cf, x_cf, _reference(x_cf, w_cf, b_cf, eps, "channels_first"))

    # --- channels_last, C=64: lane-packed (k=2) ---
    C = 64
    x_cl2 = jax.random.normal(k3, (4, 32, 32, C), dtype=jnp.float32)
    w_cl2, b_cl2 = make_params(C)
    y_cl2 = layer_norm(x_cl2, w_cl2, b_cl2, eps=eps, data_format="channels_last")
    jax.block_until_ready(y_cl2)
    _check(y_cl2, x_cl2, _reference(x_cl2, w_cl2, b_cl2, eps, "channels_last"))

    # --- row count not divisible by 128//C: unpacked MXU fallback ---
    C = 32
    x_tail = jax.random.normal(k4, (1, 17, 17, C), dtype=jnp.float32)
    w_t, b_t = make_params(C)
    y_tail = layer_norm(x_tail, w_t, b_t, eps=eps, data_format="channels_last")
    jax.block_until_ready(y_tail)
    _check(y_tail, x_tail, _reference(x_tail, w_t, b_t, eps, "channels_last"))

    # --- forced multi-step grid + ragged tail block (small block override) ---
    C = 32
    x_multi = jax.random.normal(k5, (1, 20, 23, C), dtype=jnp.float32)
    w_m, b_m = make_params(C)
    y_multi = layer_norm(x_multi, w_m, b_m, eps=eps,
                         data_format="channels_last", block_bytes=16 << 10)
    jax.block_until_ready(y_multi)
    _check(y_multi, x_multi, _reference(x_multi, w_m, b_m, eps, "channels_last"))

    # --- forced multi-step grid on the channels_first (spatial-tiled) path ---
    C = 4
    x_cf2 = jax.random.normal(k6, (2, C, 32, 32), dtype=jnp.float32)
    w_cf2, b_cf2 = make_params(C)
    y_cf2 = layer_norm(x_cf2, w_cf2, b_cf2, eps=eps,
                       data_format="channels_first", block_bytes=8 << 10)
    jax.block_until_ready(y_cf2)
    _check(y_cf2, x_cf2, _reference(x_cf2, w_cf2, b_cf2, eps, "channels_first"))

    print("KERNEL_OK")
</pallas_src>

<mosaic_0001>
module attributes {stable_mosaic.version = 11 : i64} {
  func.func @_ln_rows_mxu_kernel(%arg0: i32, %arg1: memref<32x128xf32, #tpu.memory_space<vmem>>, %arg2: memref<1x128xf32, #tpu.memory_space<vmem>>, %arg3: memref<1x128xf32, #tpu.memory_space<vmem>>, %arg4: memref<128x128xf32, #tpu.memory_space<vmem>>, %arg5: memref<32x128xf32, #tpu.memory_space<vmem>>) attributes {dimension_semantics = [#tpu.dimension_semantics<parallel>], iteration_bounds = array<i64: 1>, scalar_prefetch = 0 : i64, scratch_operands = 0 : i64, tpu.core_type = #tpu.core_type<tc>, window_params = [{transform_indices = @transform_0, window_bounds = array<i64: 32, 128>}, {pipeline_mode = #tpu.pipeline_mode<synchronous>, transform_indices = @transform_1, window_bounds = array<i64: 1, 128>}, {pipeline_mode = #tpu.pipeline_mode<synchronous>, transform_indices = @transform_2, window_bounds = array<i64: 1, 128>}, {pipeline_mode = #tpu.pipeline_mode<synchronous>, transform_indices = @transform_3, window_bounds = array<i64: 128, 128>}, {transform_indices = @transform_4, window_bounds = array<i64: 32, 128>}]} {
    %c0 = arith.constant 0 : index
    %c0_0 = arith.constant 0 : index
    %0 = vector.load %arg1[%c0, %c0_0] : memref<32x128xf32, #tpu.memory_space<vmem>>, vector<32x128xf32>
    %c0_1 = arith.constant 0 : index
    %c0_2 = arith.constant 0 : index
    %1 = vector.load %arg4[%c0_1, %c0_2] : memref<128x128xf32, #tpu.memory_space<vmem>>, vector<128x128xf32>
    %cst = arith.constant dense<0.000000e+00> : vector<32x128xf32>
    %2 = tpu.matmul %0, %1, %cst {dimension_numbers = #tpu.dot_dimension_numbers<[1], [0], [0], [1], [0, 0, 1, 1], [], []>, precision = #tpu.contract_precision<fp32>} : vector<32x128xf32>, vector<128x128xf32>, vector<32x128xf32> -> vector<32x128xf32>
    %3 = arith.mulf %0, %0 : vector<32x128xf32>
    %cst_3 = arith.constant dense<0.000000e+00> : vector<32x128xf32>
    %4 = tpu.matmul %3, %1, %cst_3 {dimension_numbers = #tpu.dot_dimension_numbers<[1], [0], [0], [1], [0, 0, 1, 1], [], []>, precision = #tpu.contract_precision<fp32>} : vector<32x128xf32>, vector<128x128xf32>, vector<32x128xf32> -> vector<32x128xf32>
    %cst_4 = arith.constant 3.125000e-02 : f32
    %5 = vector.broadcast %cst_4 : f32 to vector<32x128xf32>
    %6 = arith.mulf %2, %5 : vector<32x128xf32>
    %cst_5 = arith.constant 3.125000e-02 : f32
    %7 = vector.broadcast %cst_5 : f32 to vector<32x128xf32>
    %8 = arith.mulf %4, %7 : vector<32x128xf32>
    %9 = arith.mulf %6, %6 : vector<32x128xf32>
    %10 = arith.subf %8, %9 : vector<32x128xf32>
    %cst_6 = arith.constant 0.000000e+00 : f32
    %11 = vector.broadcast %cst_6 : f32 to vector<32x128xf32>
    %12 = arith.maximumf %10, %11 : vector<32x128xf32>
    %cst_7 = arith.constant 9.99999997E-7 : f32
    %13 = vector.broadcast %cst_7 : f32 to vector<32x128xf32>
    %14 = arith.addf %12, %13 : vector<32x128xf32>
    %15 = math.rsqrt %14 : vector<32x128xf32>
    %16 = arith.subf %0, %6 : vector<32x128xf32>
    %17 = arith.mulf %16, %15 : vector<32x128xf32>
    %c0_8 = arith.constant 0 : index
    %c0_9 = arith.constant 0 : index
    %18 = vector.load %arg2[%c0_8, %c0_9] : memref<1x128xf32, #tpu.memory_space<vmem>>, vector<1x128xf32>
    %19 = vector.broadcast %18 : vector<1x128xf32> to vector<32x128xf32>
    %20 = arith.mulf %17, %19 : vector<32x128xf32>
    %c0_10 = arith.constant 0 : index
    %c0_11 = arith.constant 0 : index
    %21 = vector.load %arg3[%c0_10, %c0_11] : memref<1x128xf32, #tpu.memory_space<vmem>>, vector<1x128xf32>
    %22 = vector.broadcast %21 : vector<1x128xf32> to vector<32x128xf32>
    %23 = arith.addf %20, %22 : vector<32x128xf32>
    %c0_12 = arith.constant 0 : index
    %c0_13 = arith.constant 0 : index
    %24 = vector.load %arg5[%c0_12, %c0_13] : memref<32x128xf32, #tpu.memory_space<vmem>>, vector<32x128xf32>
    tpu.vector_store %arg5[%c0_12, %c0_13], %23 {strides = array<i32>} : memref<32x128xf32, #tpu.memory_space<vmem>>, vector<32x128xf32>,
    return
  }
  func.func @transform_0(%arg0: i32) -> (i32, i32) {
    %c0_i32 = arith.constant 0 : i32
    %c0_i32_0 = arith.constant 0 : i32
    return %arg0, %c0_i32 : i32, i32
  }
  func.func @transform_1(%arg0: i32) -> (i32, i32) {
    %c0_i32 = arith.constant 0 : i32
    %c0_i32_0 = arith.constant 0 : i32
    %c0_i32_1 = arith.constant 0 : i32
    return %c0_i32, %c0_i32_0 : i32, i32
  }
  func.func @transform_2(%arg0: i32) -> (i32, i32) {
    %c0_i32 = arith.constant 0 : i32
    %c0_i32_0 = arith.constant 0 : i32
    %c0_i32_1 = arith.constant 0 : i32
    return %c0_i32, %c0_i32_0 : i32, i32
  }
  func.func @transform_3(%arg0: i32) -> (i32, i32) {
    %c0_i32 = arith.constant 0 : i32
    %c0_i32_0 = arith.constant 0 : i32
    %c0_i32_1 = arith.constant 0 : i32
    return %c0_i32, %c0_i32_0 : i32, i32
  }
  func.func @transform_4(%arg0: i32) -> (i32, i32) {
    %c0_i32 = arith.constant 0 : i32
    %c0_i32_0 = arith.constant 0 : i32
    return %arg0, %c0_i32 : i32, i32
  }
}

</mosaic_0001>

<llo_original>
// kernel: tpu_custom_call.1
$region0: #{tpu_custom_call.1}
  #allocation0 [shape = 'u32[]', space=smem, size = 0x4, offset = 0x4, fixed_abs, tag = 'smem constant byte address 0x4 - core index']
  #allocation1 [shape = 'u32[72,128]{1,0:T(1,128)}', space=vmem, size = 0x9000, scoped, tag = 'internal scratch']
  %s0 = inlined_call_operand.hbm [shape: f32[32,128], index: 0, kind: input, shape index: {}]
  %s1 = inlined_call_operand.hbm [shape: f32[1,128], index: 1, kind: input, shape index: {}]
  %s2 = inlined_call_operand.vmem [shape: f32[1,128], index: 2, kind: input, shape index: {}]
  %s3 = inlined_call_operand.hbm [shape: f32[128,128], index: 3, kind: input, shape index: {}]
  %s4 = inlined_call_operand.hbm [shape: f32[32,128], index: 4, kind: output, shape index: {}]
  %s5 = sld [smem:[#allocation0]]
  $region38: #{tpu_custom_call.1} parent=0
    _
  %s7 = ssub.s32 1, %s5
  %s8 = scalar_select 0, %s7, %s5
  $region1: #{tpu_custom_call.1} parent=0
    #allocation2 [shape = 'u8[16384]{0}', space=vmem, size = 0x4000, scoped, tag = 'input window, operand 0, single buffered']
    #allocation3 [shape = 's32[1]{0}', space=sflag, size = 0x4, scoped, tag = 'scoped memory for tpu_custom_call.1']
    #allocation4 [shape = 's32[1]{0}', space=sflag, size = 0x4, scoped, tag = 'scoped memory for tpu_custom_call.1']
    #allocation5 [shape = 'u8[512]{0}', space=vmem, size = 0x400, scoped, tag = 'input window, operand 1, single buffered']
    #allocation6 [shape = 's32[1]{0}', space=sflag, size = 0x4, scoped, tag = 'scoped memory for tpu_custom_call.1']
    #allocation7 [shape = 'u8[65536]{0}', space=vmem, size = 0x10000, scoped, tag = 'input window, operand 3, single buffered']
    #allocation8 [shape = 'u8[16384]{0}', space=vmem, size = 0x4000, scoped, tag = 'output window, operand 0, single buffered']
    %9 = vsyncpa [#allocation3], 0
    %10 = vsyncpa [#allocation6], 0
    %11 = vsyncpa [#allocation4], 0
    // Predicated region
    $region2: #{tpu_custom_call.1} parent=1 // pred_check
      _
    $region3: #{tpu_custom_call.1} parent=1 // pred_check_branch
      %13 = sbr.rel (0) target = $region5
    $region4: #{tpu_custom_call.1} parent=1 // pred_region
      %15 = vsyncadd [#allocation3], 0
      %s16 = sshll.u32 %s0, 4
      %s17 = int_to_ptr.hbm [resolvable:$true] %s16
      %s18 = sshll.u32 [#allocation2], 4
      %s19 = int_to_ptr.vmem [resolvable:$true] %s18
      %24 = dma.hbm_to_vmem [thread:$0]  %s17, 512, %s19, [#allocation3], 128, 128, 8
    $region5: #{tpu_custom_call.1} parent=1 // pred_fallthru
      _
    // Predicated region
    $region6: #{tpu_custom_call.1} parent=1 // pred_check
      _
    $region7: #{tpu_custom_call.1} parent=1 // pred_check_branch
      %26 = sbr.rel (0) target = $region9
    $region8: #{tpu_custom_call.1} parent=1 // pred_region
      %28 = vsyncadd [#allocation6], 0
      %s30 = sshll.u32 %s1, 4
      %s31 = int_to_ptr.hbm [resolvable:$true] %s30
      %s32 = sshll.u32 [#allocation5], 4
      %s33 = int_to_ptr.vmem [resolvable:$true] %s32
      %35 = dma.hbm_to_vmem [thread:$0]  %s31, 16, %s33, [#allocation6]
    $region9: #{tpu_custom_call.1} parent=1 // pred_fallthru
      _
    // Predicated region
    $region10: #{tpu_custom_call.1} parent=1 // pred_check
      _
    $region11: #{tpu_custom_call.1} parent=1 // pred_check_branch
      %37 = sbr.rel (0) target = $region13
    $region12: #{tpu_custom_call.1} parent=1 // pred_region
      _
    $region13: #{tpu_custom_call.1} parent=1 // pred_fallthru
      _
    // Predicated region
    $region14: #{tpu_custom_call.1} parent=1 // pred_check
      _
    $region15: #{tpu_custom_call.1} parent=1 // pred_check_branch
      %39 = sbr.rel (0) target = $region17
    $region16: #{tpu_custom_call.1} parent=1 // pred_region
      %41 = vsyncadd [#allocation6], 0
      %s42 = sshll.u32 %s3, 4
      %s43 = int_to_ptr.hbm [resolvable:$true] %s42
      %s44 = sshll.u32 [#allocation7], 4
      %s45 = int_to_ptr.vmem [resolvable:$true] %s44
      %50 = dma.hbm_to_vmem [thread:$0]  %s43, 2048, %s45, [#allocation6], 128, 128, 8
    $region17: #{tpu_custom_call.1} parent=1 // pred_fallthru
      _
    // Predicated region
    $region18: #{tpu_custom_call.1} parent=1 // pred_check
      _
    $region19: #{tpu_custom_call.1} parent=1 // pred_check_branch
      %52 = sbr.rel (0) target = $region21
    $region20: #{tpu_custom_call.1} parent=1 // pred_region
      %54 = dma.done [#allocation3], 512
    $region21: #{tpu_custom_call.1} parent=1 // pred_fallthru
      _
    // Predicated region
    $region22: #{tpu_custom_call.1} parent=1 // pred_check
      _
    $region23: #{tpu_custom_call.1} parent=1 // pred_check_branch
      %56 = sbr.rel (0) target = $region25
    $region24: #{tpu_custom_call.1} parent=1 // pred_region
      %58 = dma.done [#allocation6], 16
    $region25: #{tpu_custom_call.1} parent=1 // pred_fallthru
      _
    // Predicated region
    $region26: #{tpu_custom_call.1} parent=1 // pred_check
      _
    $region27: #{tpu_custom_call.1} parent=1 // pred_check_branch
      %60 = sbr.rel (0) target = $region29
    $region28: #{tpu_custom_call.1} parent=1 // pred_region
      %62 = dma.done [#allocation6], 2048
    $region29: #{tpu_custom_call.1} parent=1 // pred_fallthru
      _
    %v63 = vld [vmem:[#allocation2] sm:$0xff]
    %v64 = vld [vmem:[#allocation2 + $0x8] sm:$0xff]
    %v65 = vld [vmem:[#allocation2 + $0x10] sm:$0xff]
    %v66 = vld [vmem:[#allocation2 + $0x18] sm:$0xff]
    %v67 = vld [vmem:[#allocation7] sm:$0xff]
    %v68 = vld [vmem:[#allocation7 + $0x8] sm:$0xff]
    %v69 = vld [vmem:[#allocation7 + $0x10] sm:$0xff]
    %v70 = vld [vmem:[#allocation7 + $0x18] sm:$0xff]
    %v71 = vld [vmem:[#allocation7 + $0x20] sm:$0xff]
    %v72 = vld [vmem:[#allocation7 + $0x28] sm:$0xff]
    %v73 = vld [vmem:[#allocation7 + $0x30] sm:$0xff]
    %v74 = vld [vmem:[#allocation7 + $0x38] sm:$0xff]
    %v75 = vld [vmem:[#allocation7 + $0x40] sm:$0xff]
    %v76 = vld [vmem:[#allocation7 + $0x48] sm:$0xff]
    %v77 = vld [vmem:[#allocation7 + $0x50] sm:$0xff]
    %v78 = vld [vmem:[#allocation7 + $0x58] sm:$0xff]
    %v79 = vld [vmem:[#allocation7 + $0x60] sm:$0xff]
    %v80 = vld [vmem:[#allocation7 + $0x68] sm:$0xff]
    %v81 = vld [vmem:[#allocation7 + $0x70] sm:$0xff]
    %v82 = vld [vmem:[#allocation7 + $0x78] sm:$0xff]
    %v83 = vand.u32 %v82, 4294901760
    %84 = vmatpush.msra.mxu0 %v83
    %v85 = vand.u32 %v81, 4294901760
    %86 = vmatpush.msra.mxu0 %v85
    %v87 = vand.u32 %v80, 4294901760
    %88 = vmatpush.msra.mxu0 %v87
    %v89 = vand.u32 %v79, 4294901760
    %90 = vmatpush.msra.mxu0 %v89
    %v91 = vand.u32 %v78, 4294901760
    %92 = vmatpush.msra.mxu0 %v91
    %v93 = vand.u32 %v77, 4294901760
    %94 = vmatpush.msra.mxu0 %v93
    %v95 = vand.u32 %v76, 4294901760
    %96 = vmatpush.msra.mxu0 %v95
    %v97 = vand.u32 %v75, 4294901760
    %98 = vmatpush.msra.mxu0 %v97
    %v99 = vand.u32 %v74, 4294901760
    %100 = vmatpush.msra.mxu0 %v99
    %v101 = vand.u32 %v73, 4294901760
    %102 = vmatpush.msra.mxu0 %v101
    %v103 = vand.u32 %v72, 4294901760
    %104 = vmatpush.msra.mxu0 %v103
    %v105 = vand.u32 %v71, 4294901760
    %106 = vmatpush.msra.mxu0 %v105
    %v107 = vand.u32 %v70, 4294901760
    %108 = vmatpush.msra.mxu0 %v107
    %v109 = vand.u32 %v69, 4294901760
    %110 = vmatpush.msra.mxu0 %v109
    %v111 = vand.u32 %v68, 4294901760
    %112 = vmatpush.msra.mxu0 %v111
    %v113 = vand.u32 %v67, 4294901760
    %114 = vmatpush.msra.mxu0 %v113
    %v115 = vand.u32 %v63, 4294901760
    %v116 = vsub.f32 %v63, %v115
    %v117 = vand.u32 %v116, 4294901760
    %v118 = vsub.f32 %v116, %v117
    %v119 = vand.u32 %v118, 4294901760
    %120 = vmatmul.f32.gmra.mxu0 %v119
    %v121 = vpop.f32.mrf.mxu0
    %v122 = vadd.f32 0.0, %v121
    %v123 = vand.u32 %v64, 4294901760
    %v124 = vsub.f32 %v64, %v123
    %v125 = vand.u32 %v124, 4294901760
    %v126 = vsub.f32 %v124, %v125
    %v127 = vand.u32 %v126, 4294901760
    %128 = vmatmul.f32.gmra.mxu0 %v127
    %v129 = vpop.f32.mrf.mxu0
    %v130 = vadd.f32 0.0, %v129
    %v131 = vand.u32 %v65, 4294901760
    %v132 = vsub.f32 %v65, %v131
    %v133 = vand.u32 %v132, 4294901760
    %v134 = vsub.f32 %v132, %v133
    %v135 = vand.u32 %v134, 4294901760
    %136 = vmatmul.f32.gmra.mxu0 %v135
    %v137 = vpop.f32.mrf.mxu0
    %v138 = vadd.f32 0.0, %v137
    %v139 = vand.u32 %v66, 4294901760
    %v140 = vsub.f32 %v66, %v139
    %v141 = vand.u32 %v140, 4294901760
    %v142 = vsub.f32 %v140, %v141
    %v143 = vand.u32 %v142, 4294901760
    %144 = vmatmul.f32.gmra.mxu0 %v143
    %v145 = vpop.f32.mrf.mxu0
    %v146 = vadd.f32 0.0, %v145
    %147 = vdwg.mxu0
    %v148 = vand.u32 %v82, 4294901760
    %v149 = vsub.f32 %v82, %v148
    %v150 = vand.u32 %v149, 4294901760
    %v151 = vsub.f32 %v149, %v150
    %v152 = vand.u32 %v151, 4294901760
    %153 = vmatpush.msra.mxu0 %v152
    %v154 = vand.u32 %v81, 4294901760
    %v155 = vsub.f32 %v81, %v154
    %v156 = vand.u32 %v155, 4294901760
    %v157 = vsub.f32 %v155, %v156
    %v158 = vand.u32 %v157, 4294901760
    %159 = vmatpush.msra.mxu0 %v158
    %v160 = vand.u32 %v80, 4294901760
    %v161 = vsub.f32 %v80, %v160
    %v162 = vand.u32 %v161, 4294901760
    %v163 = vsub.f32 %v161, %v162
    %v164 = vand.u32 %v163, 4294901760
    %165 = vmatpush.msra.mxu0 %v164
    %v166 = vand.u32 %v79, 4294901760
    %v167 = vsub.f32 %v79, %v166
    %v168 = vand.u32 %v167, 4294901760
    %v169 = vsub.f32 %v167, %v168
    %v170 = vand.u32 %v169, 4294901760
    %171 = vmatpush.msra.mxu0 %v170
    %v172 = vand.u32 %v78, 4294901760
    %v173 = vsub.f32 %v78, %v172
    %v174 = vand.u32 %v173, 4294901760
    %v175 = vsub.f32 %v173, %v174
    %v176 = vand.u32 %v175, 4294901760
    %177 = vmatpush.msra.mxu0 %v176
    %v178 = vand.u32 %v77, 4294901760
    %v179 = vsub.f32 %v77, %v178
    %v180 = vand.u32 %v179, 4294901760
    %v181 = vsub.f32 %v179, %v180
    %v182 = vand.u32 %v181, 4294901760
    %183 = vmatpush.msra.mxu0 %v182
    %v184 = vand.u32 %v76, 4294901760
    %v185 = vsub.f32 %v76, %v184
    %v186 = vand.u32 %v185, 4294901760
    %v187 = vsub.f32 %v185, %v186
    %v188 = vand.u32 %v187, 4294901760
    %189 = vmatpush.msra.mxu0 %v188
    %v190 = vand.u32 %v75, 4294901760
    %v191 = vsub.f32 %v75, %v190
    %v192 = vand.u32 %v191, 4294901760
    %v193 = vsub.f32 %v191, %v192
    %v194 = vand.u32 %v193, 4294901760
    %195 = vmatpush.msra.mxu0 %v194
    %v196 = vand.u32 %v74, 4294901760
    %v197 = vsub.f32 %v74, %v196
    %v198 = vand.u32 %v197, 4294901760
    %v199 = vsub.f32 %v197, %v198
    %v200 = vand.u32 %v199, 4294901760
    %201 = vmatpush.msra.mxu0 %v200
    %v202 = vand.u32 %v73, 4294901760
    %v203 = vsub.f32 %v73, %v202
    %v204 = vand.u32 %v203, 4294901760
    %v205 = vsub.f32 %v203, %v204
    %v206 = vand.u32 %v205, 4294901760
    %207 = vmatpush.msra.mxu0 %v206
    %v208 = vand.u32 %v72, 4294901760
    %v209 = vsub.f32 %v72, %v208
    %v210 = vand.u32 %v209, 4294901760
    %v211 = vsub.f32 %v209, %v210
    %v212 = vand.u32 %v211, 4294901760
    %213 = vmatpush.msra.mxu0 %v212
    %v214 = vand.u32 %v71, 4294901760
    %v215 = vsub.f32 %v71, %v214
    %v216 = vand.u32 %v215, 4294901760
    %v217 = vsub.f32 %v215, %v216
    %v218 = vand.u32 %v217, 4294901760
    %219 = vmatpush.msra.mxu0 %v218
    %v220 = vand.u32 %v70, 4294901760
    %v221 = vsub.f32 %v70, %v220
    %v222 = vand.u32 %v221, 4294901760
    %v223 = vsub.f32 %v221, %v222
    %v224 = vand.u32 %v223, 4294901760
    %225 = vmatpush.msra.mxu0 %v224
    %v226 = vand.u32 %v69, 4294901760
    %v227 = vsub.f32 %v69, %v226
    %v228 = vand.u32 %v227, 4294901760
    %v229 = vsub.f32 %v227, %v228
    %v230 = vand.u32 %v229, 4294901760
    %231 = vmatpush.msra.mxu0 %v230
    %v232 = vand.u32 %v68, 4294901760
    %v233 = vsub.f32 %v68, %v232
    %v234 = vand.u32 %v233, 4294901760
    %v235 = vsub.f32 %v233, %v234
    %v236 = vand.u32 %v235, 4294901760
    %237 = vmatpush.msra.mxu0 %v236
    %v238 = vand.u32 %v67, 4294901760
    %v239 = vsub.f32 %v67, %v238
    %v240 = vand.u32 %v239, 4294901760
    %v241 = vsub.f32 %v239, %v240
    %v242 = vand.u32 %v241, 4294901760
    %243 = vmatpush.msra.mxu0 %v242
    %v244 = vand.u32 %v63, 4294901760
    %245 = vmatmul.f32.gmra.mxu0 %v244
    %v246 = vpop.f32.mrf.mxu0
    %v247 = vadd.f32 %v122, %v246
    %v248 = vand.u32 %v64, 4294901760
    %249 = vmatmul.f32.gmra.mxu0 %v248
    %v250 = vpop.f32.mrf.mxu0
    %v251 = vadd.f32 %v130, %v250
    %v252 = vand.u32 %v65, 4294901760
    %253 = vmatmul.f32.gmra.mxu0 %v252
    %v254 = vpop.f32.mrf.mxu0
    %v255 = vadd.f32 %v138, %v254
    %v256 = vand.u32 %v66, 4294901760
    %257 = vmatmul.f32.gmra.mxu0 %v256
    %v258 = vpop.f32.mrf.mxu0
    %v259 = vadd.f32 %v146, %v258
    %260 = vdwg.mxu0
    %v261 = vand.u32 %v82, 4294901760
    %v262 = vsub.f32 %v82, %v261
    %263 = vmatpush.msra.mxu0 %v262
    %v264 = vand.u32 %v81, 4294901760
    %v265 = vsub.f32 %v81, %v264
    %266 = vmatpush.msra.mxu0 %v265
    %v267 = vand.u32 %v80, 4294901760
    %v268 = vsub.f32 %v80, %v267
    %269 = vmatpush.msra.mxu0 %v268
    %v270 = vand.u32 %v79, 4294901760
    %v271 = vsub.f32 %v79, %v270
    %272 = vmatpush.msra.mxu0 %v271
    %v273 = vand.u32 %v78, 4294901760
    %v274 = vsub.f32 %v78, %v273
    %275 = vmatpush.msra.mxu0 %v274
    %v276 = vand.u32 %v77, 4294901760
    %v277 = vsub.f32 %v77, %v276
    %278 = vmatpush.msra.mxu0 %v277
    %v279 = vand.u32 %v76, 4294901760
    %v280 = vsub.f32 %v76, %v279
    %281 = vmatpush.msra.mxu0 %v280
    %v282 = vand.u32 %v75, 4294901760
    %v283 = vsub.f32 %v75, %v282
    %284 = vmatpush.msra.mxu0 %v283
    %v285 = vand.u32 %v74, 4294901760
    %v286 = vsub.f32 %v74, %v285
    %287 = vmatpush.msra.mxu0 %v286
    %v288 = vand.u32 %v73, 4294901760
    %v289 = vsub.f32 %v73, %v288
    %290 = vmatpush.msra.mxu0 %v289
    %v291 = vand.u32 %v72, 4294901760
    %v292 = vsub.f32 %v72, %v291
    %293 = vmatpush.msra.mxu0 %v292
    %v294 = vand.u32 %v71, 4294901760
    %v295 = vsub.f32 %v71, %v294
    %296 = vmatpush.msra.mxu0 %v295
    %v297 = vand.u32 %v70, 4294901760
    %v298 = vsub.f32 %v70, %v297
    %299 = vmatpush.msra.mxu0 %v298
    %v300 = vand.u32 %v69, 4294901760
    %v301 = vsub.f32 %v69, %v300
    %302 = vmatpush.msra.mxu0 %v301
    %v303 = vand.u32 %v68, 4294901760
    %v304 = vsub.f32 %v68, %v303
    %305 = vmatpush.msra.mxu0 %v304
    %v306 = vand.u32 %v67, 4294901760
    %v307 = vsub.f32 %v67, %v306
    %308 = vmatpush.msra.mxu0 %v307
    %v309 = vand.u32 %v63, 4294901760
    %v310 = vsub.f32 %v63, %v309
    %311 = vmatmul.f32.gmra.mxu0 %v310
    %v312 = vpop.f32.mrf.mxu0
    %v313 = vadd.f32 %v247, %v312
    %v314 = vand.u32 %v64, 4294901760
    %v315 = vsub.f32 %v64, %v314
    %316 = vmatmul.f32.gmra.mxu0 %v315
    %v317 = vpop.f32.mrf.mxu0
    %v318 = vadd.f32 %v251, %v317
    %v319 = vand.u32 %v65, 4294901760
    %v320 = vsub.f32 %v65, %v319
    %321 = vmatmul.f32.gmra.mxu0 %v320
    %v322 = vpop.f32.mrf.mxu0
    %v323 = vadd.f32 %v255, %v322
    %v324 = vand.u32 %v66, 4294901760
    %v325 = vsub.f32 %v66, %v324
    %326 = vmatmul.f32.gmra.mxu0 %v325
    %v327 = vpop.f32.mrf.mxu0
    %v328 = vadd.f32 %v259, %v327
    %329 = vdwg.mxu0
    %v330 = vand.u32 %v82, 4294901760
    %331 = vmatpush.msra.mxu0 %v330
    %v332 = vand.u32 %v81, 4294901760
    %333 = vmatpush.msra.mxu0 %v332
    %v334 = vand.u32 %v80, 4294901760
    %335 = vmatpush.msra.mxu0 %v334
    %v336 = vand.u32 %v79, 4294901760
    %337 = vmatpush.msra.mxu0 %v336
    %v338 = vand.u32 %v78, 4294901760
    %339 = vmatpush.msra.mxu0 %v338
    %v340 = vand.u32 %v77, 4294901760
    %341 = vmatpush.msra.mxu0 %v340
    %v342 = vand.u32 %v76, 4294901760
    %343 = vmatpush.msra.mxu0 %v342
    %v344 = vand.u32 %v75, 4294901760
    %345 = vmatpush.msra.mxu0 %v344
    %v346 = vand.u32 %v74, 4294901760
    %347 = vmatpush.msra.mxu0 %v346
    %v348 = vand.u32 %v73, 4294901760
    %349 = vmatpush.msra.mxu0 %v348
    %v350 = vand.u32 %v72, 4294901760
    %351 = vmatpush.msra.mxu0 %v350
    %v352 = vand.u32 %v71, 4294901760
    %353 = vmatpush.msra.mxu0 %v352
    %v354 = vand.u32 %v70, 4294901760
    %355 = vmatpush.msra.mxu0 %v354
    %v356 = vand.u32 %v69, 4294901760
    %357 = vmatpush.msra.mxu0 %v356
    %v358 = vand.u32 %v68, 4294901760
    %359 = vmatpush.msra.mxu0 %v358
    %v360 = vand.u32 %v67, 4294901760
    %361 = vmatpush.msra.mxu0 %v360
    %v362 = vand.u32 %v63, 4294901760
    %v363 = vsub.f32 %v63, %v362
    %v364 = vand.u32 %v363, 4294901760
    %365 = vmatmul.f32.gmra.mxu0 %v364
    %v366 = vpop.f32.mrf.mxu0
    %v367 = vadd.f32 %v313, %v366
    %v368 = vand.u32 %v64, 4294901760
    %v369 = vsub.f32 %v64, %v368
    %v370 = vand.u32 %v369, 4294901760
    %371 = vmatmul.f32.gmra.mxu0 %v370
    %v372 = vpop.f32.mrf.mxu0
    %v373 = vadd.f32 %v318, %v372
    %v374 = vand.u32 %v65, 4294901760
    %v375 = vsub.f32 %v65, %v374
    %v376 = vand.u32 %v375, 4294901760
    %377 = vmatmul.f32.gmra.mxu0 %v376
    %v378 = vpop.f32.mrf.mxu0
    %v379 = vadd.f32 %v323, %v378
    %v380 = vand.u32 %v66, 4294901760
    %v381 = vsub.f32 %v66, %v380
    %v382 = vand.u32 %v381, 4294901760
    %383 = vmatmul.f32.gmra.mxu0 %v382
    %v384 = vpop.f32.mrf.mxu0
    %v385 = vadd.f32 %v328, %v384
    %386 = vdwg.mxu0
    %v387 = vand.u32 %v82, 4294901760
    %v388 = vsub.f32 %v82, %v387
    %v389 = vand.u32 %v388, 4294901760
    %390 = vmatpush.msra.mxu0 %v389
    %v391 = vand.u32 %v81, 4294901760
    %v392 = vsub.f32 %v81, %v391
    %v393 = vand.u32 %v392, 4294901760
    %394 = vmatpush.msra.mxu0 %v393
    %v395 = vand.u32 %v80, 4294901760
    %v396 = vsub.f32 %v80, %v395
    %v397 = vand.u32 %v396, 4294901760
    %398 = vmatpush.msra.mxu0 %v397
    %v399 = vand.u32 %v79, 4294901760
    %v400 = vsub.f32 %v79, %v399
    %v401 = vand.u32 %v400, 4294901760
    %402 = vmatpush.msra.mxu0 %v401
    %v403 = vand.u32 %v78, 4294901760
    %v404 = vsub.f32 %v78, %v403
    %v405 = vand.u32 %v404, 4294901760
    %406 = vmatpush.msra.mxu0 %v405
    %v407 = vand.u32 %v77, 4294901760
    %v408 = vsub.f32 %v77, %v407
    %v409 = vand.u32 %v408, 4294901760
    %410 = vmatpush.msra.mxu0 %v409
    %v411 = vand.u32 %v76, 4294901760
    %v412 = vsub.f32 %v76, %v411
    %v413 = vand.u32 %v412, 4294901760
    %414 = vmatpush.msra.mxu0 %v413
    %v415 = vand.u32 %v75, 4294901760
    %v416 = vsub.f32 %v75, %v415
    %v417 = vand.u32 %v416, 4294901760
    %418 = vmatpush.msra.mxu0 %v417
    %v419 = vand.u32 %v74, 4294901760
    %v420 = vsub.f32 %v74, %v419
    %v421 = vand.u32 %v420, 4294901760
    %422 = vmatpush.msra.mxu0 %v421
    %v423 = vand.u32 %v73, 4294901760
    %v424 = vsub.f32 %v73, %v423
    %v425 = vand.u32 %v424, 4294901760
    %426 = vmatpush.msra.mxu0 %v425
    %v427 = vand.u32 %v72, 4294901760
    %v428 = vsub.f32 %v72, %v427
    %v429 = vand.u32 %v428, 4294901760
    %430 = vmatpush.msra.mxu0 %v429
    %v431 = vand.u32 %v71, 4294901760
    %v432 = vsub.f32 %v71, %v431
    %v433 = vand.u32 %v432, 4294901760
    %434 = vmatpush.msra.mxu0 %v433
    %v435 = vand.u32 %v70, 4294901760
    %v436 = vsub.f32 %v70, %v435
    %v437 = vand.u32 %v436, 4294901760
    %438 = vmatpush.msra.mxu0 %v437
    %v439 = vand.u32 %v69, 4294901760
    %v440 = vsub.f32 %v69, %v439
    %v441 = vand.u32 %v440, 4294901760
    %442 = vmatpush.msra.mxu0 %v441
    %v443 = vand.u32 %v68, 4294901760
    %v444 = vsub.f32 %v68, %v443
    %v445 = vand.u32 %v444, 4294901760
    %446 = vmatpush.msra.mxu0 %v445
    %v447 = vand.u32 %v67, 4294901760
    %v448 = vsub.f32 %v67, %v447
    %v449 = vand.u32 %v448, 4294901760
    %450 = vmatpush.msra.mxu0 %v449
    %v451 = vand.u32 %v63, 4294901760
    %452 = vmatmul.f32.gmra.mxu0 %v451
    %v453 = vpop.f32.mrf.mxu0
    %v454 = vadd.f32 %v367, %v453
    %v455 = vand.u32 %v64, 4294901760
    %456 = vmatmul.f32.gmra.mxu0 %v455
    %v457 = vpop.f32.mrf.mxu0
    %v458 = vadd.f32 %v373, %v457
    %v459 = vand.u32 %v65, 4294901760
    %460 = vmatmul.f32.gmra.mxu0 %v459
    %v461 = vpop.f32.mrf.mxu0
    %v462 = vadd.f32 %v379, %v461
    %v463 = vand.u32 %v66, 4294901760
    %464 = vmatmul.f32.gmra.mxu0 %v463
    %v465 = vpop.f32.mrf.mxu0
    %v466 = vadd.f32 %v385, %v465
    %467 = vdwg.mxu0
    %v468 = vand.u32 %v82, 4294901760
    %469 = vmatpush.msra.mxu0 %v468
    %v470 = vand.u32 %v81, 4294901760
    %471 = vmatpush.msra.mxu0 %v470
    %v472 = vand.u32 %v80, 4294901760
    %473 = vmatpush.msra.mxu0 %v472
    %v474 = vand.u32 %v79, 4294901760
    %475 = vmatpush.msra.mxu0 %v474
    %v476 = vand.u32 %v78, 4294901760
    %477 = vmatpush.msra.mxu0 %v476
    %v478 = vand.u32 %v77, 4294901760
    %479 = vmatpush.msra.mxu0 %v478
    %v480 = vand.u32 %v76, 4294901760
    %481 = vmatpush.msra.mxu0 %v480
    %v482 = vand.u32 %v75, 4294901760
    %483 = vmatpush.msra.mxu0 %v482
    %v484 = vand.u32 %v74, 4294901760
    %485 = vmatpush.msra.mxu0 %v484
    %v486 = vand.u32 %v73, 4294901760
    %487 = vmatpush.msra.mxu0 %v486
    %v488 = vand.u32 %v72, 4294901760
    %489 = vmatpush.msra.mxu0 %v488
    %v490 = vand.u32 %v71, 4294901760
    %491 = vmatpush.msra.mxu0 %v490
    %v492 = vand.u32 %v70, 4294901760
    %493 = vmatpush.msra.mxu0 %v492
    %v494 = vand.u32 %v69, 4294901760
    %495 = vmatpush.msra.mxu0 %v494
    %v496 = vand.u32 %v68, 4294901760
    %497 = vmatpush.msra.mxu0 %v496
    %v498 = vand.u32 %v67, 4294901760
    %499 = vmatpush.msra.mxu0 %v498
    %v500 = vand.u32 %v63, 4294901760
    %501 = vmatmul.f32.gmra.mxu0 %v500
    %v502 = vpop.f32.mrf.mxu0
    %v503 = vadd.f32 %v454, %v502
    %v504 = vand.u32 %v64, 4294901760
    %505 = vmatmul.f32.gmra.mxu0 %v504
    %v506 = vpop.f32.mrf.mxu0
    %v507 = vadd.f32 %v458, %v506
    %v508 = vand.u32 %v65, 4294901760
    %509 = vmatmul.f32.gmra.mxu0 %v508
    %v510 = vpop.f32.mrf.mxu0
    %v511 = vadd.f32 %v462, %v510
    %v512 = vand.u32 %v66, 4294901760
    %513 = vmatmul.f32.gmra.mxu0 %v512
    %v514 = vpop.f32.mrf.mxu0
    %v515 = vadd.f32 %v466, %v514
    %516 = vdwg.mxu0
    %v517 = vmul.f32 %v63, %v63
    %v518 = vmul.f32 %v64, %v64
    %v519 = vmul.f32 %v65, %v65
    %v520 = vmul.f32 %v66, %v66
    %v521 = vand.u32 %v82, 4294901760
    %522 = vmatpush.msra.mxu0 %v521
    %v523 = vand.u32 %v81, 4294901760
    %524 = vmatpush.msra.mxu0 %v523
    %v525 = vand.u32 %v80, 4294901760
    %526 = vmatpush.msra.mxu0 %v525
    %v527 = vand.u32 %v79, 4294901760
    %528 = vmatpush.msra.mxu0 %v527
    %v529 = vand.u32 %v78, 4294901760
    %530 = vmatpush.msra.mxu0 %v529
    %v531 = vand.u32 %v77, 4294901760
    %532 = vmatpush.msra.mxu0 %v531
    %v533 = vand.u32 %v76, 4294901760
    %534 = vmatpush.msra.mxu0 %v533
    %v535 = vand.u32 %v75, 4294901760
    %536 = vmatpush.msra.mxu0 %v535
    %v537 = vand.u32 %v74, 4294901760
    %538 = vmatpush.msra.mxu0 %v537
    %v539 = vand.u32 %v73, 4294901760
    %540 = vmatpush.msra.mxu0 %v539
    %v541 = vand.u32 %v72, 4294901760
    %542 = vmatpush.msra.mxu0 %v541
    %v543 = vand.u32 %v71, 4294901760
    %544 = vmatpush.msra.mxu0 %v543
    %v545 = vand.u32 %v70, 4294901760
    %546 = vmatpush.msra.mxu0 %v545
    %v547 = vand.u32 %v69, 4294901760
    %548 = vmatpush.msra.mxu0 %v547
    %v549 = vand.u32 %v68, 4294901760
    %550 = vmatpush.msra.mxu0 %v549
    %v551 = vand.u32 %v67, 4294901760
    %552 = vmatpush.msra.mxu0 %v551
    %v553 = vand.u32 %v517, 4294901760
    %v554 = vsub.f32 %v517, %v553
    %v555 = vand.u32 %v554, 4294901760
    %v556 = vsub.f32 %v554, %v555
    %v557 = vand.u32 %v556, 4294901760
    %558 = vmatmul.f32.gmra.mxu0 %v557
    %v559 = vpop.f32.mrf.mxu0
    %v560 = vadd.f32 0.0, %v559
    %v561 = vand.u32 %v518, 4294901760
    %v562 = vsub.f32 %v518, %v561
    %v563 = vand.u32 %v562, 4294901760
    %v564 = vsub.f32 %v562, %v563
    %v565 = vand.u32 %v564, 4294901760
    %566 = vmatmul.f32.gmra.mxu0 %v565
    %v567 = vpop.f32.mrf.mxu0
    %v568 = vadd.f32 0.0, %v567
    %v569 = vand.u32 %v519, 4294901760
    %v570 = vsub.f32 %v519, %v569
    %v571 = vand.u32 %v570, 4294901760
    %v572 = vsub.f32 %v570, %v571
    %v573 = vand.u32 %v572, 4294901760
    %574 = vmatmul.f32.gmra.mxu0 %v573
    %v575 = vpop.f32.mrf.mxu0
    %v576 = vadd.f32 0.0, %v575
    %v577 = vand.u32 %v520, 4294901760
    %v578 = vsub.f32 %v520, %v577
    %v579 = vand.u32 %v578, 4294901760
    %v580 = vsub.f32 %v578, %v579
    %v581 = vand.u32 %v580, 4294901760
    %582 = vmatmul.f32.gmra.mxu0 %v581
    %v583 = vpop.f32.mrf.mxu0
    %v584 = vadd.f32 0.0, %v583
    %585 = vdwg.mxu0
    %v586 = vand.u32 %v82, 4294901760
    %v587 = vsub.f32 %v82, %v586
    %v588 = vand.u32 %v587, 4294901760
    %v589 = vsub.f32 %v587, %v588
    %v590 = vand.u32 %v589, 4294901760
    %591 = vmatpush.msra.mxu0 %v590
    %v592 = vand.u32 %v81, 4294901760
    %v593 = vsub.f32 %v81, %v592
    %v594 = vand.u32 %v593, 4294901760
    %v595 = vsub.f32 %v593, %v594
    %v596 = vand.u32 %v595, 4294901760
    %597 = vmatpush.msra.mxu0 %v596
    %v598 = vand.u32 %v80, 4294901760
    %v599 = vsub.f32 %v80, %v598
    %v600 = vand.u32 %v599, 4294901760
    %v601 = vsub.f32 %v599, %v600
    %v602 = vand.u32 %v601, 4294901760
    %603 = vmatpush.msra.mxu0 %v602
    %v604 = vand.u32 %v79, 4294901760
    %v605 = vsub.f32 %v79, %v604
    %v606 = vand.u32 %v605, 4294901760
    %v607 = vsub.f32 %v605, %v606
    %v608 = vand.u32 %v607, 4294901760
    %609 = vmatpush.msra.mxu0 %v608
    %v610 = vand.u32 %v78, 4294901760
    %v611 = vsub.f32 %v78, %v610
    %v612 = vand.u32 %v611, 4294901760
    %v613 = vsub.f32 %v611, %v612
    %v614 = vand.u32 %v613, 4294901760
    %615 = vmatpush.msra.mxu0 %v614
    %v616 = vand.u32 %v77, 4294901760
    %v617 = vsub.f32 %v77, %v616
    %v618 = vand.u32 %v617, 4294901760
    %v619 = vsub.f32 %v617, %v618
    %v620 = vand.u32 %v619, 4294901760
    %621 = vmatpush.msra.mxu0 %v620
    %v622 = vand.u32 %v76, 4294901760
    %v623 = vsub.f32 %v76, %v622
    %v624 = vand.u32 %v623, 4294901760
    %v625 = vsub.f32 %v623, %v624
    %v626 = vand.u32 %v625, 4294901760
    %627 = vmatpush.msra.mxu0 %v626
    %v628 = vand.u32 %v75, 4294901760
    %v629 = vsub.f32 %v75, %v628
    %v630 = vand.u32 %v629, 4294901760
    %v631 = vsub.f32 %v629, %v630
    %v632 = vand.u32 %v631, 4294901760
    %633 = vmatpush.msra.mxu0 %v632
    %v634 = vand.u32 %v74, 4294901760
    %v635 = vsub.f32 %v74, %v634
    %v636 = vand.u32 %v635, 4294901760
    %v637 = vsub.f32 %v635, %v636
    %v638 = vand.u32 %v637, 4294901760
    %639 = vmatpush.msra.mxu0 %v638
    %v640 = vand.u32 %v73, 4294901760
    %v641 = vsub.f32 %v73, %v640
    %v642 = vand.u32 %v641, 4294901760
    %v643 = vsub.f32 %v641, %v642
    %v644 = vand.u32 %v643, 4294901760
    %645 = vmatpush.msra.mxu0 %v644
    %v646 = vand.u32 %v72, 4294901760
    %v647 = vsub.f32 %v72, %v646
    %v648 = vand.u32 %v647, 4294901760
    %v649 = vsub.f32 %v647, %v648
    %v650 = vand.u32 %v649, 4294901760
    %651 = vmatpush.msra.mxu0 %v650
    %v652 = vand.u32 %v71, 4294901760
    %v653 = vsub.f32 %v71, %v652
    %v654 = vand.u32 %v653, 4294901760
    %v655 = vsub.f32 %v653, %v654
    %v656 = vand.u32 %v655, 4294901760
    %657 = vmatpush.msra.mxu0 %v656
    %v658 = vand.u32 %v70, 4294901760
    %v659 = vsub.f32 %v70, %v658
    %v660 = vand.u32 %v659, 4294901760
    %v661 = vsub.f32 %v659, %v660
    %v662 = vand.u32 %v661, 4294901760
    %663 = vmatpush.msra.mxu0 %v662
    %v664 = vand.u32 %v69, 4294901760
    %v665 = vsub.f32 %v69, %v664
    %v666 = vand.u32 %v665, 4294901760
    %v667 = vsub.f32 %v665, %v666
    %v668 = vand.u32 %v667, 4294901760
    %669 = vmatpush.msra.mxu0 %v668
    %v670 = vand.u32 %v68, 4294901760
    %v671 = vsub.f32 %v68, %v670
    %v672 = vand.u32 %v671, 4294901760
    %v673 = vsub.f32 %v671, %v672
    %v674 = vand.u32 %v673, 4294901760
    %675 = vmatpush.msra.mxu0 %v674
    %v676 = vand.u32 %v67, 4294901760
    %v677 = vsub.f32 %v67, %v676
    %v678 = vand.u32 %v677, 4294901760
    %v679 = vsub.f32 %v677, %v678
    %v680 = vand.u32 %v679, 4294901760
    %681 = vmatpush.msra.mxu0 %v680
    %v682 = vand.u32 %v517, 4294901760
    %683 = vmatmul.f32.gmra.mxu0 %v682
    %v684 = vpop.f32.mrf.mxu0
    %v685 = vadd.f32 %v560, %v684
    %v686 = vand.u32 %v518, 4294901760
    %687 = vmatmul.f32.gmra.mxu0 %v686
    %v688 = vpop.f32.mrf.mxu0
    %v689 = vadd.f32 %v568, %v688
    %v690 = vand.u32 %v519, 4294901760
    %691 = vmatmul.f32.gmra.mxu0 %v690
    %v692 = vpop.f32.mrf.mxu0
    %v693 = vadd.f32 %v576, %v692
    %v694 = vand.u32 %v520, 4294901760
    %695 = vmatmul.f32.gmra.mxu0 %v694
    %v696 = vpop.f32.mrf.mxu0
    %v697 = vadd.f32 %v584, %v696
    %698 = vdwg.mxu0
    %v699 = vand.u32 %v82, 4294901760
    %v700 = vsub.f32 %v82, %v699
    %701 = vmatpush.msra.mxu0 %v700
    %v702 = vand.u32 %v81, 4294901760
    %v703 = vsub.f32 %v81, %v702
    %704 = vmatpush.msra.mxu0 %v703
    %v705 = vand.u32 %v80, 4294901760
    %v706 = vsub.f32 %v80, %v705
    %707 = vmatpush.msra.mxu0 %v706
    %v708 = vand.u32 %v79, 4294901760
    %v709 = vsub.f32 %v79, %v708
    %710 = vmatpush.msra.mxu0 %v709
    %v711 = vand.u32 %v78, 4294901760
    %v712 = vsub.f32 %v78, %v711
    %713 = vmatpush.msra.mxu0 %v712
    %v714 = vand.u32 %v77, 4294901760
    %v715 = vsub.f32 %v77, %v714
    %716 = vmatpush.msra.mxu0 %v715
    %v717 = vand.u32 %v76, 4294901760
    %v718 = vsub.f32 %v76, %v717
    %719 = vmatpush.msra.mxu0 %v718
    %v720 = vand.u32 %v75, 4294901760
    %v721 = vsub.f32 %v75, %v720
    %722 = vmatpush.msra.mxu0 %v721
    %v723 = vand.u32 %v74, 4294901760
    %v724 = vsub.f32 %v74, %v723
    %725 = vmatpush.msra.mxu0 %v724
    %v726 = vand.u32 %v73, 4294901760
    %v727 = vsub.f32 %v73, %v726
    %728 = vmatpush.msra.mxu0 %v727
    %v729 = vand.u32 %v72, 4294901760
    %v730 = vsub.f32 %v72, %v729
    %731 = vmatpush.msra.mxu0 %v730
    %v732 = vand.u32 %v71, 4294901760
    %v733 = vsub.f32 %v71, %v732
    %734 = vmatpush.msra.mxu0 %v733
    %v735 = vand.u32 %v70, 4294901760
    %v736 = vsub.f32 %v70, %v735
    %737 = vmatpush.msra.mxu0 %v736
    %v738 = vand.u32 %v69, 4294901760
    %v739 = vsub.f32 %v69, %v738
    %740 = vmatpush.msra.mxu0 %v739
    %v741 = vand.u32 %v68, 4294901760
    %v742 = vsub.f32 %v68, %v741
    %743 = vmatpush.msra.mxu0 %v742
    %v744 = vand.u32 %v67, 4294901760
    %v745 = vsub.f32 %v67, %v744
    %746 = vmatpush.msra.mxu0 %v745
    %v747 = vand.u32 %v517, 4294901760
    %v748 = vsub.f32 %v517, %v747
    %749 = vmatmul.f32.gmra.mxu0 %v748
    %v750 = vpop.f32.mrf.mxu0
    %v751 = vadd.f32 %v685, %v750
    %v752 = vand.u32 %v518, 4294901760
    %v753 = vsub.f32 %v518, %v752
    %754 = vmatmul.f32.gmra.mxu0 %v753
    %v755 = vpop.f32.mrf.mxu0
    %v756 = vadd.f32 %v689, %v755
    %v757 = vand.u32 %v519, 4294901760
    %v758 = vsub.f32 %v519, %v757
    %759 = vmatmul.f32.gmra.mxu0 %v758
    %v760 = vpop.f32.mrf.mxu0
    %v761 = vadd.f32 %v693, %v760
    %v762 = vand.u32 %v520, 4294901760
    %v763 = vsub.f32 %v520, %v762
    %764 = vmatmul.f32.gmra.mxu0 %v763
    %v765 = vpop.f32.mrf.mxu0
    %v766 = vadd.f32 %v697, %v765
    %767 = vdwg.mxu0
    %v768 = vand.u32 %v82, 4294901760
    %769 = vmatpush.msra.mxu0 %v768
    %v770 = vand.u32 %v81, 4294901760
    %771 = vmatpush.msra.mxu0 %v770
    %v772 = vand.u32 %v80, 4294901760
    %773 = vmatpush.msra.mxu0 %v772
    %v774 = vand.u32 %v79, 4294901760
    %775 = vmatpush.msra.mxu0 %v774
    %v776 = vand.u32 %v78, 4294901760
    %777 = vmatpush.msra.mxu0 %v776
    %v778 = vand.u32 %v77, 4294901760
    %779 = vmatpush.msra.mxu0 %v778
    %v780 = vand.u32 %v76, 4294901760
    %781 = vmatpush.msra.mxu0 %v780
    %v782 = vand.u32 %v75, 4294901760
    %783 = vmatpush.msra.mxu0 %v782
    %v784 = vand.u32 %v74, 4294901760
    %785 = vmatpush.msra.mxu0 %v784
    %v786 = vand.u32 %v73, 4294901760
    %787 = vmatpush.msra.mxu0 %v786
    %v788 = vand.u32 %v72, 4294901760
    %789 = vmatpush.msra.mxu0 %v788
    %v790 = vand.u32 %v71, 4294901760
    %791 = vmatpush.msra.mxu0 %v790
    %v792 = vand.u32 %v70, 4294901760
    %793 = vmatpush.msra.mxu0 %v792
    %v794 = vand.u32 %v69, 4294901760
    %795 = vmatpush.msra.mxu0 %v794
    %v796 = vand.u32 %v68, 4294901760
    %797 = vmatpush.msra.mxu0 %v796
    %v798 = vand.u32 %v67, 4294901760
    %799 = vmatpush.msra.mxu0 %v798
    %v800 = vand.u32 %v517, 4294901760
    %v801 = vsub.f32 %v517, %v800
    %v802 = vand.u32 %v801, 4294901760
    %803 = vmatmul.f32.gmra.mxu0 %v802
    %v804 = vpop.f32.mrf.mxu0
    %v805 = vadd.f32 %v751, %v804
    %v806 = vand.u32 %v518, 4294901760
    %v807 = vsub.f32 %v518, %v806
    %v808 = vand.u32 %v807, 4294901760
    %809 = vmatmul.f32.gmra.mxu0 %v808
    %v810 = vpop.f32.mrf.mxu0
    %v811 = vadd.f32 %v756, %v810
    %v812 = vand.u32 %v519, 4294901760
    %v813 = vsub.f32 %v519, %v812
    %v814 = vand.u32 %v813, 4294901760
    %815 = vmatmul.f32.gmra.mxu0 %v814
    %v816 = vpop.f32.mrf.mxu0
    %v817 = vadd.f32 %v761, %v816
    %v818 = vand.u32 %v520, 4294901760
    %v819 = vsub.f32 %v520, %v818
    %v820 = vand.u32 %v819, 4294901760
    %821 = vmatmul.f32.gmra.mxu0 %v820
    %v822 = vpop.f32.mrf.mxu0
    %v823 = vadd.f32 %v766, %v822
    %824 = vdwg.mxu0
    %v825 = vand.u32 %v82, 4294901760
    %v826 = vsub.f32 %v82, %v825
    %v827 = vand.u32 %v826, 4294901760
    %828 = vmatpush.msra.mxu0 %v827
    %v829 = vand.u32 %v81, 4294901760
    %v830 = vsub.f32 %v81, %v829
    %v831 = vand.u32 %v830, 4294901760
    %832 = vmatpush.msra.mxu0 %v831
    %v833 = vand.u32 %v80, 4294901760
    %v834 = vsub.f32 %v80, %v833
    %v835 = vand.u32 %v834, 4294901760
    %836 = vmatpush.msra.mxu0 %v835
    %v837 = vand.u32 %v79, 4294901760
    %v838 = vsub.f32 %v79, %v837
    %v839 = vand.u32 %v838, 4294901760
    %840 = vmatpush.msra.mxu0 %v839
    %v841 = vand.u32 %v78, 4294901760
    %v842 = vsub.f32 %v78, %v841
    %v843 = vand.u32 %v842, 4294901760
    %844 = vmatpush.msra.mxu0 %v843
    %v845 = vand.u32 %v77, 4294901760
    %v846 = vsub.f32 %v77, %v845
    %v847 = vand.u32 %v846, 4294901760
    %848 = vmatpush.msra.mxu0 %v847
    %v849 = vand.u32 %v76, 4294901760
    %v850 = vsub.f32 %v76, %v849
    %v851 = vand.u32 %v850, 4294901760
    %852 = vmatpush.msra.mxu0 %v851
    %v853 = vand.u32 %v75, 4294901760
    %v854 = vsub.f32 %v75, %v853
    %v855 = vand.u32 %v854, 4294901760
    %856 = vmatpush.msra.mxu0 %v855
    %v857 = vand.u32 %v74, 4294901760
    %v858 = vsub.f32 %v74, %v857
    %v859 = vand.u32 %v858, 4294901760
    %860 = vmatpush.msra.mxu0 %v859
    %v861 = vand.u32 %v73, 4294901760
    %v862 = vsub.f32 %v73, %v861
    %v863 = vand.u32 %v862, 4294901760
    %864 = vmatpush.msra.mxu0 %v863
    %v865 = vand.u32 %v72, 4294901760
    %v866 = vsub.f32 %v72, %v865
    %v867 = vand.u32 %v866, 4294901760
    %868 = vmatpush.msra.mxu0 %v867
    %v869 = vand.u32 %v71, 4294901760
    %v870 = vsub.f32 %v71, %v869
    %v871 = vand.u32 %v870, 4294901760
    %872 = vmatpush.msra.mxu0 %v871
    %v873 = vand.u32 %v70, 4294901760
    %v874 = vsub.f32 %v70, %v873
    %v875 = vand.u32 %v874, 4294901760
    %876 = vmatpush.msra.mxu0 %v875
    %v877 = vand.u32 %v69, 4294901760
    %v878 = vsub.f32 %v69, %v877
    %v879 = vand.u32 %v878, 4294901760
    %880 = vmatpush.msra.mxu0 %v879
    %v881 = vand.u32 %v68, 4294901760
    %v882 = vsub.f32 %v68, %v881
    %v883 = vand.u32 %v882, 4294901760
    %884 = vmatpush.msra.mxu0 %v883
    %v885 = vand.u32 %v67, 4294901760
    %v886 = vsub.f32 %v67, %v885
    %v887 = vand.u32 %v886, 4294901760
    %888 = vmatpush.msra.mxu0 %v887
    %v889 = vand.u32 %v517, 4294901760
    %890 = vmatmul.f32.gmra.mxu0 %v889
    %v891 = vpop.f32.mrf.mxu0
    %v892 = vadd.f32 %v805, %v891
    %v893 = vand.u32 %v518, 4294901760
    %894 = vmatmul.f32.gmra.mxu0 %v893
    %v895 = vpop.f32.mrf.mxu0
    %v896 = vadd.f32 %v811, %v895
    %v897 = vand.u32 %v519, 4294901760
    %898 = vmatmul.f32.gmra.mxu0 %v897
    %v899 = vpop.f32.mrf.mxu0
    %v900 = vadd.f32 %v817, %v899
    %v901 = vand.u32 %v520, 4294901760
    %902 = vmatmul.f32.gmra.mxu0 %v901
    %v903 = vpop.f32.mrf.mxu0
    %v904 = vadd.f32 %v823, %v903
    %905 = vdwg.mxu0
    %v906 = vand.u32 %v82, 4294901760
    %907 = vmatpush.msra.mxu0 %v906
    %v908 = vand.u32 %v81, 4294901760
    %909 = vmatpush.msra.mxu0 %v908
    %v910 = vand.u32 %v80, 4294901760
    %911 = vmatpush.msra.mxu0 %v910
    %v912 = vand.u32 %v79, 4294901760
    %913 = vmatpush.msra.mxu0 %v912
    %v914 = vand.u32 %v78, 4294901760
    %915 = vmatpush.msra.mxu0 %v914
    %v916 = vand.u32 %v77, 4294901760
    %917 = vmatpush.msra.mxu0 %v916
    %v918 = vand.u32 %v76, 4294901760
    %919 = vmatpush.msra.mxu0 %v918
    %v920 = vand.u32 %v75, 4294901760
    %921 = vmatpush.msra.mxu0 %v920
    %v922 = vand.u32 %v74, 4294901760
    %923 = vmatpush.msra.mxu0 %v922
    %v924 = vand.u32 %v73, 4294901760
    %925 = vmatpush.msra.mxu0 %v924
    %v926 = vand.u32 %v72, 4294901760
    %927 = vmatpush.msra.mxu0 %v926
    %v928 = vand.u32 %v71, 4294901760
    %929 = vmatpush.msra.mxu0 %v928
    %v930 = vand.u32 %v70, 4294901760
    %931 = vmatpush.msra.mxu0 %v930
    %v932 = vand.u32 %v69, 4294901760
    %933 = vmatpush.msra.mxu0 %v932
    %v934 = vand.u32 %v68, 4294901760
    %935 = vmatpush.msra.mxu0 %v934
    %v936 = vand.u32 %v67, 4294901760
    %937 = vmatpush.msra.mxu0 %v936
    %v938 = vand.u32 %v517, 4294901760
    %939 = vmatmul.f32.gmra.mxu0 %v938
    %v940 = vpop.f32.mrf.mxu0
    %v941 = vadd.f32 %v892, %v940
    %v942 = vand.u32 %v518, 4294901760
    %943 = vmatmul.f32.gmra.mxu0 %v942
    %v944 = vpop.f32.mrf.mxu0
    %v945 = vadd.f32 %v896, %v944
    %v946 = vand.u32 %v519, 4294901760
    %947 = vmatmul.f32.gmra.mxu0 %v946
    %v948 = vpop.f32.mrf.mxu0
    %v949 = vadd.f32 %v900, %v948
    %v950 = vand.u32 %v520, 4294901760
    %951 = vmatmul.f32.gmra.mxu0 %v950
    %v952 = vpop.f32.mrf.mxu0
    %v953 = vadd.f32 %v904, %v952
    %954 = vdwg.mxu0
    %v955 = vmul.f32 %v503, 0.03125
    %v956 = vmul.f32 %v507, 0.03125
    %v957 = vmul.f32 %v511, 0.03125
    %v958 = vmul.f32 %v515, 0.03125
    %v959 = vmul.f32 %v941, 0.03125
    %v960 = vmul.f32 %v945, 0.03125
    %v961 = vmul.f32 %v949, 0.03125
    %v962 = vmul.f32 %v953, 0.03125
    %v963 = vmul.f32 %v955, %v955
    %v964 = vmul.f32 %v956, %v956
    %v965 = vmul.f32 %v957, %v957
    %v966 = vmul.f32 %v958, %v958
    %v967 = vsub.f32 %v959, %v963
    %v968 = vsub.f32 %v960, %v964
    %v969 = vsub.f32 %v961, %v965
    %v970 = vsub.f32 %v962, %v966
    %v971 = vmax.f32 %v967, 0.0
    %v972 = vmax.f32 %v968, 0.0
    %v973 = vmax.f32 %v969, 0.0
    %v974 = vmax.f32 %v970, 0.0
    %v975 = vadd.f32 %v971, 1e-06
    %v976 = vadd.f32 %v972, 1e-06
    %v977 = vadd.f32 %v973, 1e-06
    %v978 = vadd.f32 %v974, 1e-06
    %v979 = vrsqrt.pop %v975
    %v980 = vmul.f32 %v979, %v975
    %v981 = vmul.f32 %v980, %v979
    %v982 = vmul.f32 0.5, %v981
    %v983 = vsub.f32 1.5, %v982
    %v984 = vmul.f32 %v979, %v983
    %vm985 = vweird.f32 %v975
    %vm986 = vweird.f32 %v979
    %vm987 = vmor %vm985, %vm986
    %v988 = vsel %vm987, %v979, %v984
    %v989 = vrsqrt.pop %v976
    %v990 = vmul.f32 %v989, %v976
    %v991 = vmul.f32 %v990, %v989
    %v992 = vmul.f32 0.5, %v991
    %v993 = vsub.f32 1.5, %v992
    %v994 = vmul.f32 %v989, %v993
    %vm995 = vweird.f32 %v976
    %vm996 = vweird.f32 %v989
    %vm997 = vmor %vm995, %vm996
    %v998 = vsel %vm997, %v989, %v994
    %v999 = vrsqrt.pop %v977
    %v1000 = vmul.f32 %v999, %v977
    %v1001 = vmul.f32 %v1000, %v999
    %v1002 = vmul.f32 0.5, %v1001
    %v1003 = vsub.f32 1.5, %v1002
    %v1004 = vmul.f32 %v999, %v1003
    %vm1005 = vweird.f32 %v977
    %vm1006 = vweird.f32 %v999
    %vm1007 = vmor %vm1005, %vm1006
    %v1008 = vsel %vm1007, %v999, %v1004
    %v1009 = vrsqrt.pop %v978
    %v1010 = vmul.f32 %v1009, %v978
    %v1011 = vmul.f32 %v1010, %v1009
    %v1012 = vmul.f32 0.5, %v1011
    %v1013 = vsub.f32 1.5, %v1012
    %v1014 = vmul.f32 %v1009, %v1013
    %vm1015 = vweird.f32 %v978
    %vm1016 = vweird.f32 %v1009
    %vm1017 = vmor %vm1015, %vm1016
    %v1018 = vsel %vm1017, %v1009, %v1014
    %v1019 = vsub.f32 %v63, %v955
    %v1020 = vsub.f32 %v64, %v956
    %v1021 = vsub.f32 %v65, %v957
    %v1022 = vsub.f32 %v66, %v958
    %v1023 = vmul.f32 %v1019, %v988
    %v1024 = vmul.f32 %v1020, %v998
    %v1025 = vmul.f32 %v1021, %v1008
    %v1026 = vmul.f32 %v1022, %v1018
    %v1027 = vld [vmem:[#allocation5] sm:$0x1]
    %v1029 = vperm.slane %v1027, 0
    %v1031 = vmul.f32 %v1023, %v1029
    %v1032 = vmul.f32 %v1024, %v1029
    %v1033 = vmul.f32 %v1025, %v1029
    %v1034 = vmul.f32 %v1026, %v1029
    %v1035 = vld [vmem:[%s2] sm:$0x1]
    %v1037 = vperm.slane %v1035, 0
    %v1039 = vadd.f32 %v1031, %v1037
    %v1040 = vadd.f32 %v1032, %v1037
    %v1041 = vadd.f32 %v1033, %v1037
    %v1042 = vadd.f32 %v1034, %v1037
    %1043 = vst [vmem:[#allocation8] sm:$0xff] %v1039
    %1044 = vst [vmem:[#allocation8 + $0x8] sm:$0xff] %v1040
    %1045 = vst [vmem:[#allocation8 + $0x10] sm:$0xff] %v1041
    %1046 = vst [vmem:[#allocation8 + $0x18] sm:$0xff] %v1042
    // Predicated region
    $region30: #{tpu_custom_call.1} parent=1 // pred_check
      _
    $region31: #{tpu_custom_call.1} parent=1 // pred_check_branch
      %1048 = sbr.rel (0) target = $region33
    $region32: #{tpu_custom_call.1} parent=1 // pred_region
      %1050 = vsyncadd [#allocation4], 0
      %s1051 = sshll.u32 [#allocation8], 4
      %s1052 = int_to_ptr.vmem [resolvable:$true] %s1051
      %s1053 = sshll.u32 %s4, 4
      %s1054 = int_to_ptr.hbm [resolvable:$true] %s1053
      %1059 = dma.vmem_to_hbm [thread:$0]  %s1052, 512, %s1054, [#allocation4], 128, 128, 8
    $region33: #{tpu_custom_call.1} parent=1 // pred_fallthru
      _
    // Predicated region
    $region34: #{tpu_custom_call.1} parent=1 // pred_check
      _
    $region35: #{tpu_custom_call.1} parent=1 // pred_check_branch
      %1061 = sbr.rel (0) target = $region37
    $region36: #{tpu_custom_call.1} parent=1 // pred_region
      %1063 = dma.done [#allocation4], 512
    $region37: #{tpu_custom_call.1} parent=1 // pred_fallthru
      _
    %1064 = vsyncpa [#allocation3], 1
    %1065 = vsyncpa [#allocation6], 1
    %1066 = vsyncpa [#allocation4], 1

</llo_original>
